<compile_context>
chip_gen: v7x
topology: tpu7x:2x2x1
jax: 0.10.0
libtpu: 0.0.40
codegen_flags: <defaults>
</compile_context>

<pallas_src>
import math

import jax
import jax.numpy as jnp
from jax import lax
from jax.experimental import pallas as pl
from jax.experimental.pallas import tpu as pltpu


# ----------------------------------------------------------------------------
# Model configuration (matches the PyTorch module instantiation)
# ----------------------------------------------------------------------------
INPUT_CHANNELS = 50        # forced by x.unsqueeze(1).repeat(1, 50, 1)
HIDDEN = 32
NUM_LAYERS = 2             # fused kernel below is specialised for 2 layers
NUM_CLASSES = 5
CONV_OUT = 16
KSIZE = 3
FC1_OUT = 64

G = 4 * HIDDEN             # per-layer gate width            (128)
GW = 2 * G                 # both layers' gates side by side (256)

# --------------------------- packed parameter slab ---------------------------
# Single (R_TOTAL, 256) f32 slab -> ONE HBM->VMEM DMA for all parameters.
# Large matmul blocks start on 8-row (sublane-tile) boundaries.
R_CONV_W = 0                       # 4 rows,  lanes [0:32)
R_CONV_B = R_CONV_W + 4            # 1 row,   lanes [0:32)
R_BIAS_PRE = R_CONV_B + 1          # 1 row,   [b_ih0+b_hh0 | b_ih1+b_hh1]
R_BFC1 = R_BIAS_PRE + 1            # 1 row,   lanes [0:64)
R_BFC2 = R_BFC1 + 1                # 1 row,   lanes [0:NUM_CLASSES)
R_WPRE = 8                         # 16 rows, [w_ih0^T | 0]
R_WREC = R_WPRE + CONV_OUT         # 64 rows, [[w_hh0^T | w_ih1^T],[0 | w_hh1^T]]
R_WFC1 = R_WREC + 2 * HIDDEN       # 32 rows, lanes [0:64)
R_WFC2 = R_WFC1 + HIDDEN           # 64 rows, lanes [0:NUM_CLASSES)
R_TOTAL = R_WFC2 + FC1_OUT         # 184 rows (multiple of 8)


def _gelu(x):
    # nn.GELU() default (erf formulation)
    return 0.5 * x * (1.0 + lax.erf(x * (1.0 / math.sqrt(2.0))))


_VMEM = pl.BlockSpec(memory_space=pltpu.MemorySpace.VMEM)


# ----------------------------------------------------------------------------
# Fused kernel: conv(+GELU+pool, last pooled position only)
#               -> pipelined 2-layer LSTM -> fc1 + GELU + fc2
# ----------------------------------------------------------------------------
def _fused_kernel(x_ref, p_ref, o_ref):
    H = HIDDEN
    B, L = x_ref.shape
    T = B                                   # LSTM time axis == input batch dim
    f32 = jnp.float32

    # ---- static views into the packed parameter slab ------------------------
    conv_w = p_ref[R_CONV_W:R_CONV_W + 4, 0:2 * CONV_OUT]           # (4, 32)
    conv_b = p_ref[R_CONV_B:R_CONV_B + 1, 0:2 * CONV_OUT]           # (1, 32)
    bias_pre = p_ref[R_BIAS_PRE:R_BIAS_PRE + 1, :]                  # (1, 256)
    b_fc1 = p_ref[R_BFC1:R_BFC1 + 1, 0:FC1_OUT]                     # (1, 64)
    b_fc2 = p_ref[R_BFC2:R_BFC2 + 1, 0:NUM_CLASSES]                 # (1, 5)
    w_pre = p_ref[R_WPRE:R_WPRE + CONV_OUT, :]                      # (16, 256)
    w_rec = p_ref[R_WREC:R_WREC + 2 * H, :]                         # (64, 256)
    w_fc1 = p_ref[R_WFC1:R_WFC1 + H, 0:FC1_OUT]                     # (32, 64)
    w_fc2 = p_ref[R_WFC2:R_WFC2 + FC1_OUT, 0:NUM_CLASSES]           # (64, 5)

    # ---- Conv1d(50->16,k=3,pad=1) + GELU + MaxPool1d(2), last pooled idx only
    # Both contributing conv positions read from one static 4-column window of
    # x; the right pad tap is folded into the packed conv weights.
    win = x_ref[:, L - 4:L]                                          # (B, 4)
    acts = _gelu(jnp.dot(win, conv_w, preferred_element_type=f32) + conv_b)  # (B, 32)
    seq0 = jnp.maximum(acts[:, 0:CONV_OUT], acts[:, CONV_OUT:2 * CONV_OUT])  # (B, 16)

    # ---- layer-0 x-path gates for all T steps + per-layer biases (1 matmul) -
    # pre[t] = [ x_t @ w_ih0^T + b0 | b1 ]                           (T, 256)
    pre = jnp.dot(seq0, w_pre, preferred_element_type=f32) + bias_pre

    # ---- lane masks (built once, hoisted out of the recurrence) -------------
    lane = lax.broadcasted_iota(jnp.int32, (1, GW), 1)
    lane_m = lane % G
    g_mask = jnp.logical_and(lane_m >= 2 * H, lane_m < 3 * H)   # tanh (g) lanes
    keep_l0 = (lane < G).astype(f32)                            # layer-0 half
    lane64 = lax.broadcasted_iota(jnp.int32, (1, 2 * H), 1)
    keep_h0 = (lane64 < H).astype(f32)                          # layer-0 half of hh

    # ---- software-pipelined 2-layer LSTM recurrence --------------------------
    # step s: layer 0 consumes timestep s (s<T), layer 1 consumes timestep s-1
    # (s>=1).  Both cells advance from ONE fused MXU push:
    #   [h0 | h1] (1,64) @ [[w_hh0^T | w_ih1^T],[0 | w_hh1^T]] (64,256).
    # Cell update is full-width with XLU rolls: c lives at the f-gate lanes,
    # h at the o-gate lanes (no sub-vreg lane slices on the serial chain).
    hh = jnp.zeros((1, 2 * H), f32)          # [h0 | h1]
    c_keep = jnp.zeros((1, GW), f32)         # c0 @ lanes [H:2H), c1 @ [G+H:G+2H)
    hs = []
    for s in range(T + 1):                   # static unroll, T+1 pipeline steps
        if s == 0:
            gates = pre[0:1, :]              # h == 0 -> recurrent matmul is zero
        else:
            row = min(s, T - 1)              # layer-0 half is unused at s == T
            gates = (jnp.dot(hh, w_rec, preferred_element_type=f32)
                     + pre[row:row + 1, :])
        # one 256-lane sigmoid + one 256-lane tanh, select the g lanes
        a = jnp.where(g_mask, jnp.tanh(gates), jax.nn.sigmoid(gates))
        # i*g lands on the i lanes; f*c on the f lanes -> new c on the f lanes
        ig = a * pltpu.roll(a, GW - 2 * H, axis=1)
        c_keep = pltpu.roll(ig, H, axis=1) + a * c_keep
        # h = o * tanh(c), lands on the o lanes
        h_at_o = a * jnp.tanh(pltpu.roll(c_keep, 2 * H, axis=1))
        hh = jnp.concatenate(
            [h_at_o[:, 3 * H:G], h_at_o[:, G + 3 * H:GW]], axis=1)   # (1, 64)
        if s == 0:
            # layer 1 has not consumed any input yet -> its state stays zero
            c_keep = c_keep * keep_l0
            hh = hh * keep_h0
        else:
            hs.append(hh)                    # hh[:, H:2H] == layer-1 h at t=s-1

    seq1 = jnp.concatenate(hs, axis=0)[:, H:2 * H]                   # (T, H)

    # ---- head: Dropout (inference identity) -> GELU(fc1) -> fc2 -------------
    # TODO(synk): nn.Dropout is inference-mode identity here; a training-mode
    #             mask would use pltpu.prng_seed / pltpu.prng_random_bits.
    hid = _gelu(jnp.dot(seq1, w_fc1, preferred_element_type=f32) + b_fc1)
    o_ref[...] = jnp.dot(hid, w_fc2, preferred_element_type=f32) + b_fc2


def cnn_lstm_forward(x, param_slab):
    """Fused forward pass.  x: (B, L) float32, param_slab from pack_params()."""
    B, _ = x.shape
    return pl.pallas_call(
        _fused_kernel,
        out_shape=jax.ShapeDtypeStruct((B, NUM_CLASSES), jnp.float32),
        in_specs=[_VMEM, _VMEM],
        out_specs=_VMEM,
    )(x, param_slab)


# ----------------------------------------------------------------------------
# One-time parameter packing (prepare step; NOT on the per-call path)
# ----------------------------------------------------------------------------
def pack_params(params, seq_len):
    """Pack every parameter into a single (184, 256) f32 slab (one DMA)."""
    assert NUM_LAYERS == 2, "fused kernel is specialised for num_layers == 2"
    assert seq_len >= 4
    H = HIDDEN
    f32 = jnp.float32
    slab = jnp.zeros((R_TOTAL, GW), f32)

    # Conv1d: all 50 input channels see the same x, so pre-sum over C_in (exact).
    # Two pooled taps (positions 2*(L//2-1) and +1) packed against a shared
    # 4-column x window; out-of-range (pad) taps are simply dropped (zero).
    w_eff = jnp.sum(params["conv_w"], axis=1).T.astype(f32)          # (K, 16)
    blk = jnp.zeros((4, 2 * CONV_OUT), f32)
    if seq_len % 2 == 0:
        # window = x[L-4:L]; p0 = L-2 uses cols 1..3, p1 = L-1 uses cols 2..3
        blk = blk.at[1:4, 0:CONV_OUT].set(w_eff)
        blk = blk.at[2:4, CONV_OUT:].set(w_eff[0:2])
    else:
        # window = x[L-4:L]; p0 = L-3 uses cols 0..2, p1 = L-2 uses cols 1..3
        blk = blk.at[0:3, 0:CONV_OUT].set(w_eff)
        blk = blk.at[1:4, CONV_OUT:].set(w_eff)
    slab = slab.at[R_CONV_W:R_CONV_W + 4, 0:2 * CONV_OUT].set(blk)
    slab = slab.at[R_CONV_B, 0:CONV_OUT].set(params["conv_b"].astype(f32))
    slab = slab.at[R_CONV_B, CONV_OUT:2 * CONV_OUT].set(params["conv_b"].astype(f32))

    l0, l1 = params["lstm"]
    slab = slab.at[R_BIAS_PRE, 0:G].set((l0["b_ih"] + l0["b_hh"]).astype(f32))
    slab = slab.at[R_BIAS_PRE, G:GW].set((l1["b_ih"] + l1["b_hh"]).astype(f32))

    slab = slab.at[R_BFC1, 0:FC1_OUT].set(params["fc1_b"].astype(f32))
    slab = slab.at[R_BFC2, 0:NUM_CLASSES].set(params["fc2_b"].astype(f32))

    # layer-0 x-path projection (biases live in the R_BIAS_PRE row)
    slab = slab.at[R_WPRE:R_WPRE + CONV_OUT, 0:G].set(l0["w_ih"].T.astype(f32))

    # fused block-diagonal recurrent weight: [h0 | h1] -> both layers' gates
    slab = slab.at[R_WREC:R_WREC + H, 0:G].set(l0["w_hh"].T.astype(f32))
    slab = slab.at[R_WREC:R_WREC + H, G:GW].set(l1["w_ih"].T.astype(f32))
    slab = slab.at[R_WREC + H:R_WREC + 2 * H, G:GW].set(l1["w_hh"].T.astype(f32))

    slab = slab.at[R_WFC1:R_WFC1 + H, 0:FC1_OUT].set(params["fc1_w"].T.astype(f32))
    slab = slab.at[R_WFC2:R_WFC2 + FC1_OUT, 0:NUM_CLASSES].set(
        params["fc2_w"].T.astype(f32))
    return slab


# ----------------------------------------------------------------------------
# Parameters (deterministic, PyTorch-default-like uniform init)
# ----------------------------------------------------------------------------
def init_params(key):
    def u(k, shape, s):
        return jax.random.uniform(k, shape, jnp.float32, -s, s)

    keys = jax.random.split(key, 2 + 4 * NUM_LAYERS + 4)
    p = {}
    s_conv = 1.0 / math.sqrt(INPUT_CHANNELS * KSIZE)
    p["conv_w"] = u(keys[0], (CONV_OUT, INPUT_CHANNELS, KSIZE), s_conv)
    p["conv_b"] = u(keys[1], (CONV_OUT,), s_conv)
    p["lstm"] = []
    idx = 2
    s_lstm = 1.0 / math.sqrt(HIDDEN)
    for layer in range(NUM_LAYERS):
        in_size = CONV_OUT if layer == 0 else HIDDEN
        p["lstm"].append(
            dict(
                w_ih=u(keys[idx + 0], (4 * HIDDEN, in_size), s_lstm),
                w_hh=u(keys[idx + 1], (4 * HIDDEN, HIDDEN), s_lstm),
                b_ih=u(keys[idx + 2], (4 * HIDDEN,), s_lstm),
                b_hh=u(keys[idx + 3], (4 * HIDDEN,), s_lstm),
            )
        )
        idx += 4
    s1 = 1.0 / math.sqrt(HIDDEN)
    p["fc1_w"] = u(keys[idx + 0], (FC1_OUT, HIDDEN), s1)
    p["fc1_b"] = u(keys[idx + 1], (FC1_OUT,), s1)
    s2 = 1.0 / math.sqrt(FC1_OUT)
    p["fc2_w"] = u(keys[idx + 2], (NUM_CLASSES, FC1_OUT), s2)
    p["fc2_b"] = u(keys[idx + 3], (NUM_CLASSES,), s2)
    return p


# ----------------------------------------------------------------------------
# Pure-JAX reference (full, unreduced pipeline) for correctness check
# ----------------------------------------------------------------------------
def reference_forward(x, params):
    B, L = x.shape
    xr = jnp.broadcast_to(x[:, None, :], (B, INPUT_CHANNELS, L))
    xp = jnp.pad(xr, ((0, 0), (0, 0), (1, 1)))
    w, bc = params["conv_w"], params["conv_b"]
    conv = sum(
        jnp.einsum("bcl,oc->bol", xp[:, :, k:k + L], w[:, :, k]) for k in range(KSIZE)
    ) + bc[None, :, None]
    conv = _gelu(conv)
    pooled = jnp.max(conv.reshape(B, CONV_OUT, L // 2, 2), axis=-1)
    seq = jnp.transpose(pooled, (0, 2, 1))  # (T=B, N=L//2, 16)
    for lp in params["lstm"]:
        T, N, _ = seq.shape
        H = HIDDEN
        h = jnp.zeros((N, H), jnp.float32)
        c = jnp.zeros((N, H), jnp.float32)
        outs = []
        for t in range(T):
            g = seq[t] @ lp["w_ih"].T + h @ lp["w_hh"].T + lp["b_ih"] + lp["b_hh"]
            i_g = jax.nn.sigmoid(g[:, :H])
            f_g = jax.nn.sigmoid(g[:, H:2 * H])
            g_g = jnp.tanh(g[:, 2 * H:3 * H])
            o_g = jax.nn.sigmoid(g[:, 3 * H:])
            c = f_g * c + i_g * g_g
            h = o_g * jnp.tanh(c)
            outs.append(h)
        seq = jnp.stack(outs)
    last = seq[:, -1, :]
    h1 = _gelu(last @ params["fc1_w"].T + params["fc1_b"])
    return h1 @ params["fc2_w"].T + params["fc2_b"]


if __name__ == "__main__":
    key = jax.random.PRNGKey(0)
    kx, kp = jax.random.split(key)
    B, L = 4, 16  # x: (batch=4, seq_len=16)
    x = jax.random.normal(kx, (B, L), jnp.float32)
    params = init_params(kp)

    slab = pack_params(params, L)          # one-time prepare step (not per call)

    fwd = jax.jit(cnn_lstm_forward)
    out = jax.block_until_ready(fwd(x, slab))

    ref = reference_forward(x, params)
    assert out.shape == (B, NUM_CLASSES), out.shape
    assert jnp.allclose(out, ref, rtol=1e-4, atol=1e-4), (out, ref)
    print("KERNEL_OK")
</pallas_src>

<mosaic_0001>
module attributes {stable_mosaic.version = 11 : i64} {
  func.func @_fused_kernel(%arg0: memref<4x16xf32, #tpu.memory_space<vmem>>, %arg1: memref<184x256xf32, #tpu.memory_space<vmem>>, %arg2: memref<4x5xf32, #tpu.memory_space<vmem>>) attributes {dimension_semantics = [], scalar_prefetch = 0 : i64, scratch_operands = 0 : i64, tpu.core_type = #tpu.core_type<tc>} {
    %c0 = arith.constant 0 : index
    %c0_0 = arith.constant 0 : index
    %0 = vector.load %arg1[%c0, %c0_0] : memref<184x256xf32, #tpu.memory_space<vmem>>, vector<4x32xf32>
    %c4 = arith.constant 4 : index
    %c0_1 = arith.constant 0 : index
    %1 = vector.load %arg1[%c4, %c0_1] : memref<184x256xf32, #tpu.memory_space<vmem>>, vector<1x32xf32>
    %c5 = arith.constant 5 : index
    %c0_2 = arith.constant 0 : index
    %2 = vector.load %arg1[%c5, %c0_2] : memref<184x256xf32, #tpu.memory_space<vmem>>, vector<1x256xf32>
    %c6 = arith.constant 6 : index
    %c0_3 = arith.constant 0 : index
    %3 = vector.load %arg1[%c6, %c0_3] : memref<184x256xf32, #tpu.memory_space<vmem>>, vector<1x64xf32>
    %c7 = arith.constant 7 : index
    %c0_4 = arith.constant 0 : index
    %4 = vector.load %arg1[%c7, %c0_4] : memref<184x256xf32, #tpu.memory_space<vmem>>, vector<1x5xf32>
    %c8 = arith.constant 8 : index
    %c0_5 = arith.constant 0 : index
    %5 = vector.load %arg1[%c8, %c0_5] : memref<184x256xf32, #tpu.memory_space<vmem>>, vector<16x256xf32>
    %c24 = arith.constant 24 : index
    %c0_6 = arith.constant 0 : index
    %6 = vector.load %arg1[%c24, %c0_6] : memref<184x256xf32, #tpu.memory_space<vmem>>, vector<64x256xf32>
    %c88 = arith.constant 88 : index
    %c0_7 = arith.constant 0 : index
    %7 = vector.load %arg1[%c88, %c0_7] : memref<184x256xf32, #tpu.memory_space<vmem>>, vector<32x64xf32>
    %c120 = arith.constant 120 : index
    %c0_8 = arith.constant 0 : index
    %8 = vector.load %arg1[%c120, %c0_8] : memref<184x256xf32, #tpu.memory_space<vmem>>, vector<64x5xf32>
    %c0_9 = arith.constant 0 : index
    %c12 = arith.constant 12 : index
    %9 = vector.load %arg0[%c0_9, %c12] : memref<4x16xf32, #tpu.memory_space<vmem>>, vector<4x4xf32>
    %cst = arith.constant dense<0.000000e+00> : vector<4x32xf32>
    %10 = tpu.matmul %9, %0, %cst {dimension_numbers = #tpu.dot_dimension_numbers<[1], [0], [0], [1], [0, 0, 1, 1], [], []>} : vector<4x4xf32>, vector<4x32xf32>, vector<4x32xf32> -> vector<4x32xf32>
    %11 = vector.broadcast %1 : vector<1x32xf32> to vector<4x32xf32>
    %12 = arith.addf %10, %11 : vector<4x32xf32>
    %cst_10 = arith.constant 5.000000e-01 : f32
    %13 = vector.broadcast %cst_10 : f32 to vector<4x32xf32>
    %14 = arith.mulf %13, %12 : vector<4x32xf32>
    %cst_11 = arith.constant 0.707106769 : f32
    %15 = vector.broadcast %cst_11 : f32 to vector<4x32xf32>
    %16 = arith.mulf %12, %15 : vector<4x32xf32>
    %17 = math.erf %16 : vector<4x32xf32>
    %cst_12 = arith.constant 1.000000e+00 : f32
    %18 = vector.broadcast %cst_12 : f32 to vector<4x32xf32>
    %19 = arith.addf %18, %17 : vector<4x32xf32>
    %20 = arith.mulf %14, %19 : vector<4x32xf32>
    %21 = vector.extract_strided_slice %20 {offsets = [0, 0], sizes = [4, 16], strides = [1, 1]} : vector<4x32xf32> to vector<4x16xf32>
    %22 = vector.extract_strided_slice %20 {offsets = [0, 16], sizes = [4, 16], strides = [1, 1]} : vector<4x32xf32> to vector<4x16xf32>
    %23 = arith.maximumf %21, %22 : vector<4x16xf32>
    %cst_13 = arith.constant dense<0.000000e+00> : vector<4x256xf32>
    %24 = tpu.matmul %23, %5, %cst_13 {dimension_numbers = #tpu.dot_dimension_numbers<[1], [0], [0], [1], [0, 0, 1, 1], [], []>} : vector<4x16xf32>, vector<16x256xf32>, vector<4x256xf32> -> vector<4x256xf32>
    %25 = vector.broadcast %2 : vector<1x256xf32> to vector<4x256xf32>
    %26 = arith.addf %24, %25 : vector<4x256xf32>
    %27 = tpu.iota {dimensions = array<i32: 1>} : vector<1x256xi32>
    %c128_i32 = arith.constant 128 : i32
    %c0_i32 = arith.constant 0 : i32
    %28 = arith.cmpi eq, %c128_i32, %c0_i32 : i32
    %c1_i32 = arith.constant 1 : i32
    %29 = arith.select %28, %c1_i32, %c128_i32 : i32
    %30 = vector.broadcast %29 : i32 to vector<1x256xi32>
    %31 = arith.remsi %27, %30 : vector<1x256xi32>
    %c0_i32_14 = arith.constant 0 : i32
    %32 = vector.broadcast %c0_i32_14 : i32 to vector<1x256xi32>
    %33 = arith.cmpi ne, %31, %32 : vector<1x256xi32>
    %c0_i32_15 = arith.constant 0 : i32
    %34 = vector.broadcast %c0_i32_15 : i32 to vector<1x256xi32>
    %35 = arith.cmpi slt, %31, %34 : vector<1x256xi32>
    %c0_i32_16 = arith.constant 0 : i32
    %36 = arith.cmpi slt, %29, %c0_i32_16 : i32
    %37 = vector.broadcast %36 : i1 to vector<1x256xi1>
    %38 = vector.broadcast %37 : vector<1x256xi1> to vector<1x256xi1>
    %39 = arith.xori %35, %38 : vector<1x256xi1>
    %40 = arith.andi %39, %33 : vector<1x256xi1>
    %41 = vector.broadcast %29 : i32 to vector<1x256xi32>
    %42 = arith.addi %31, %41 : vector<1x256xi32>
    %43 = arith.select %40, %42, %31 : vector<1x256xi1>, vector<1x256xi32>
    %c64_i32 = arith.constant 64 : i32
    %44 = vector.broadcast %c64_i32 : i32 to vector<1x256xi32>
    %45 = arith.cmpi sge, %43, %44 : vector<1x256xi32>
    %c96_i32 = arith.constant 96 : i32
    %46 = vector.broadcast %c96_i32 : i32 to vector<1x256xi32>
    %47 = arith.cmpi slt, %43, %46 : vector<1x256xi32>
    %48 = arith.andi %45, %47 : vector<1x256xi1>
    %c128_i32_17 = arith.constant 128 : i32
    %49 = vector.broadcast %c128_i32_17 : i32 to vector<1x256xi32>
    %50 = arith.cmpi slt, %27, %49 : vector<1x256xi32>
    %51 = arith.extui %50 : vector<1x256xi1> to vector<1x256xi32>
    %52 = arith.sitofp %51 : vector<1x256xi32> to vector<1x256xf32>
    %53 = tpu.iota {dimensions = array<i32: 1>} : vector<1x64xi32>
    %c32_i32 = arith.constant 32 : i32
    %54 = vector.broadcast %c32_i32 : i32 to vector<1x64xi32>
    %55 = arith.cmpi slt, %53, %54 : vector<1x64xi32>
    %56 = arith.extui %55 : vector<1x64xi1> to vector<1x64xi32>
    %57 = arith.sitofp %56 : vector<1x64xi32> to vector<1x64xf32>
    %cst_18 = arith.constant 0.000000e+00 : f32
    %58 = vector.broadcast %cst_18 : f32 to vector<1x256xf32>
    %59 = vector.extract_strided_slice %26 {offsets = [0, 0], sizes = [1, 256], strides = [1, 1]} : vector<4x256xf32> to vector<1x256xf32>
    %60 = math.tanh %59 : vector<1x256xf32>
    %61 = arith.negf %59 : vector<1x256xf32>
    %62 = math.exp %61 : vector<1x256xf32>
    %cst_19 = arith.constant 1.000000e+00 : f32
    %63 = vector.broadcast %cst_19 : f32 to vector<1x256xf32>
    %64 = arith.addf %63, %62 : vector<1x256xf32>
    %65 = arith.divf %63, %64 : vector<1x256xf32>
    %66 = arith.select %48, %60, %65 : vector<1x256xi1>, vector<1x256xf32>
    %c192_i32 = arith.constant 192 : i32
    %67 = tpu.dynamic_rotate %66 by %c192_i32 dim 1 : vector<1x256xf32>, i32 -> vector<1x256xf32>
    %68 = arith.mulf %66, %67 : vector<1x256xf32>
    %c32_i32_20 = arith.constant 32 : i32
    %69 = tpu.dynamic_rotate %68 by %c32_i32_20 dim 1 : vector<1x256xf32>, i32 -> vector<1x256xf32>
    %70 = arith.mulf %66, %58 : vector<1x256xf32>
    %71 = arith.addf %69, %70 : vector<1x256xf32>
    %c64_i32_21 = arith.constant 64 : i32
    %72 = tpu.dynamic_rotate %71 by %c64_i32_21 dim 1 : vector<1x256xf32>, i32 -> vector<1x256xf32>
    %73 = math.tanh %72 : vector<1x256xf32>
    %74 = arith.mulf %66, %73 : vector<1x256xf32>
    %75 = vector.extract_strided_slice %74 {offsets = [0, 96], sizes = [1, 32], strides = [1, 1]} : vector<1x256xf32> to vector<1x32xf32>
    %76 = vector.extract_strided_slice %74 {offsets = [0, 224], sizes = [1, 32], strides = [1, 1]} : vector<1x256xf32> to vector<1x32xf32>
    %77 = tpu.concatenate %75, %76 in 1 : vector<1x32xf32>, vector<1x32xf32> -> vector<1x64xf32>
    %78 = arith.mulf %71, %52 : vector<1x256xf32>
    %79 = arith.mulf %77, %57 : vector<1x64xf32>
    %cst_22 = arith.constant dense<0.000000e+00> : vector<1x256xf32>
    %80 = tpu.matmul %79, %6, %cst_22 {dimension_numbers = #tpu.dot_dimension_numbers<[1], [0], [0], [1], [0, 0, 1, 1], [], []>} : vector<1x64xf32>, vector<64x256xf32>, vector<1x256xf32> -> vector<1x256xf32>
    %81 = vector.extract_strided_slice %26 {offsets = [1, 0], sizes = [1, 256], strides = [1, 1]} : vector<4x256xf32> to vector<1x256xf32>
    %82 = arith.addf %80, %81 : vector<1x256xf32>
    %83 = math.tanh %82 : vector<1x256xf32>
    %84 = arith.negf %82 : vector<1x256xf32>
    %85 = math.exp %84 : vector<1x256xf32>
    %cst_23 = arith.constant 1.000000e+00 : f32
    %86 = vector.broadcast %cst_23 : f32 to vector<1x256xf32>
    %87 = arith.addf %86, %85 : vector<1x256xf32>
    %88 = arith.divf %86, %87 : vector<1x256xf32>
    %89 = arith.select %48, %83, %88 : vector<1x256xi1>, vector<1x256xf32>
    %c192_i32_24 = arith.constant 192 : i32
    %90 = tpu.dynamic_rotate %89 by %c192_i32_24 dim 1 : vector<1x256xf32>, i32 -> vector<1x256xf32>
    %91 = arith.mulf %89, %90 : vector<1x256xf32>
    %c32_i32_25 = arith.constant 32 : i32
    %92 = tpu.dynamic_rotate %91 by %c32_i32_25 dim 1 : vector<1x256xf32>, i32 -> vector<1x256xf32>
    %93 = arith.mulf %89, %78 : vector<1x256xf32>
    %94 = arith.addf %92, %93 : vector<1x256xf32>
    %c64_i32_26 = arith.constant 64 : i32
    %95 = tpu.dynamic_rotate %94 by %c64_i32_26 dim 1 : vector<1x256xf32>, i32 -> vector<1x256xf32>
    %96 = math.tanh %95 : vector<1x256xf32>
    %97 = arith.mulf %89, %96 : vector<1x256xf32>
    %98 = vector.extract_strided_slice %97 {offsets = [0, 96], sizes = [1, 32], strides = [1, 1]} : vector<1x256xf32> to vector<1x32xf32>
    %99 = vector.extract_strided_slice %97 {offsets = [0, 224], sizes = [1, 32], strides = [1, 1]} : vector<1x256xf32> to vector<1x32xf32>
    %100 = tpu.concatenate %98, %99 in 1 : vector<1x32xf32>, vector<1x32xf32> -> vector<1x64xf32>
    %cst_27 = arith.constant dense<0.000000e+00> : vector<1x256xf32>
    %101 = tpu.matmul %100, %6, %cst_27 {dimension_numbers = #tpu.dot_dimension_numbers<[1], [0], [0], [1], [0, 0, 1, 1], [], []>} : vector<1x64xf32>, vector<64x256xf32>, vector<1x256xf32> -> vector<1x256xf32>
    %102 = vector.extract_strided_slice %26 {offsets = [2, 0], sizes = [1, 256], strides = [1, 1]} : vector<4x256xf32> to vector<1x256xf32>
    %103 = arith.addf %101, %102 : vector<1x256xf32>
    %104 = math.tanh %103 : vector<1x256xf32>
    %105 = arith.negf %103 : vector<1x256xf32>
    %106 = math.exp %105 : vector<1x256xf32>
    %cst_28 = arith.constant 1.000000e+00 : f32
    %107 = vector.broadcast %cst_28 : f32 to vector<1x256xf32>
    %108 = arith.addf %107, %106 : vector<1x256xf32>
    %109 = arith.divf %107, %108 : vector<1x256xf32>
    %110 = arith.select %48, %104, %109 : vector<1x256xi1>, vector<1x256xf32>
    %c192_i32_29 = arith.constant 192 : i32
    %111 = tpu.dynamic_rotate %110 by %c192_i32_29 dim 1 : vector<1x256xf32>, i32 -> vector<1x256xf32>
    %112 = arith.mulf %110, %111 : vector<1x256xf32>
    %c32_i32_30 = arith.constant 32 : i32
    %113 = tpu.dynamic_rotate %112 by %c32_i32_30 dim 1 : vector<1x256xf32>, i32 -> vector<1x256xf32>
    %114 = arith.mulf %110, %94 : vector<1x256xf32>
    %115 = arith.addf %113, %114 : vector<1x256xf32>
    %c64_i32_31 = arith.constant 64 : i32
    %116 = tpu.dynamic_rotate %115 by %c64_i32_31 dim 1 : vector<1x256xf32>, i32 -> vector<1x256xf32>
    %117 = math.tanh %116 : vector<1x256xf32>
    %118 = arith.mulf %110, %117 : vector<1x256xf32>
    %119 = vector.extract_strided_slice %118 {offsets = [0, 96], sizes = [1, 32], strides = [1, 1]} : vector<1x256xf32> to vector<1x32xf32>
    %120 = vector.extract_strided_slice %118 {offsets = [0, 224], sizes = [1, 32], strides = [1, 1]} : vector<1x256xf32> to vector<1x32xf32>
    %121 = tpu.concatenate %119, %120 in 1 : vector<1x32xf32>, vector<1x32xf32> -> vector<1x64xf32>
    %cst_32 = arith.constant dense<0.000000e+00> : vector<1x256xf32>
    %122 = tpu.matmul %121, %6, %cst_32 {dimension_numbers = #tpu.dot_dimension_numbers<[1], [0], [0], [1], [0, 0, 1, 1], [], []>} : vector<1x64xf32>, vector<64x256xf32>, vector<1x256xf32> -> vector<1x256xf32>
    %123 = vector.extract_strided_slice %26 {offsets = [3, 0], sizes = [1, 256], strides = [1, 1]} : vector<4x256xf32> to vector<1x256xf32>
    %124 = arith.addf %122, %123 : vector<1x256xf32>
    %125 = math.tanh %124 : vector<1x256xf32>
    %126 = arith.negf %124 : vector<1x256xf32>
    %127 = math.exp %126 : vector<1x256xf32>
    %cst_33 = arith.constant 1.000000e+00 : f32
    %128 = vector.broadcast %cst_33 : f32 to vector<1x256xf32>
    %129 = arith.addf %128, %127 : vector<1x256xf32>
    %130 = arith.divf %128, %129 : vector<1x256xf32>
    %131 = arith.select %48, %125, %130 : vector<1x256xi1>, vector<1x256xf32>
    %c192_i32_34 = arith.constant 192 : i32
    %132 = tpu.dynamic_rotate %131 by %c192_i32_34 dim 1 : vector<1x256xf32>, i32 -> vector<1x256xf32>
    %133 = arith.mulf %131, %132 : vector<1x256xf32>
    %c32_i32_35 = arith.constant 32 : i32
    %134 = tpu.dynamic_rotate %133 by %c32_i32_35 dim 1 : vector<1x256xf32>, i32 -> vector<1x256xf32>
    %135 = arith.mulf %131, %115 : vector<1x256xf32>
    %136 = arith.addf %134, %135 : vector<1x256xf32>
    %c64_i32_36 = arith.constant 64 : i32
    %137 = tpu.dynamic_rotate %136 by %c64_i32_36 dim 1 : vector<1x256xf32>, i32 -> vector<1x256xf32>
    %138 = math.tanh %137 : vector<1x256xf32>
    %139 = arith.mulf %131, %138 : vector<1x256xf32>
    %140 = vector.extract_strided_slice %139 {offsets = [0, 96], sizes = [1, 32], strides = [1, 1]} : vector<1x256xf32> to vector<1x32xf32>
    %141 = vector.extract_strided_slice %139 {offsets = [0, 224], sizes = [1, 32], strides = [1, 1]} : vector<1x256xf32> to vector<1x32xf32>
    %142 = tpu.concatenate %140, %141 in 1 : vector<1x32xf32>, vector<1x32xf32> -> vector<1x64xf32>
    %cst_37 = arith.constant dense<0.000000e+00> : vector<1x256xf32>
    %143 = tpu.matmul %142, %6, %cst_37 {dimension_numbers = #tpu.dot_dimension_numbers<[1], [0], [0], [1], [0, 0, 1, 1], [], []>} : vector<1x64xf32>, vector<64x256xf32>, vector<1x256xf32> -> vector<1x256xf32>
    %144 = vector.extract_strided_slice %26 {offsets = [3, 0], sizes = [1, 256], strides = [1, 1]} : vector<4x256xf32> to vector<1x256xf32>
    %145 = arith.addf %143, %144 : vector<1x256xf32>
    %146 = math.tanh %145 : vector<1x256xf32>
    %147 = arith.negf %145 : vector<1x256xf32>
    %148 = math.exp %147 : vector<1x256xf32>
    %cst_38 = arith.constant 1.000000e+00 : f32
    %149 = vector.broadcast %cst_38 : f32 to vector<1x256xf32>
    %150 = arith.addf %149, %148 : vector<1x256xf32>
    %151 = arith.divf %149, %150 : vector<1x256xf32>
    %152 = arith.select %48, %146, %151 : vector<1x256xi1>, vector<1x256xf32>
    %c192_i32_39 = arith.constant 192 : i32
    %153 = tpu.dynamic_rotate %152 by %c192_i32_39 dim 1 : vector<1x256xf32>, i32 -> vector<1x256xf32>
    %154 = arith.mulf %152, %153 : vector<1x256xf32>
    %c32_i32_40 = arith.constant 32 : i32
    %155 = tpu.dynamic_rotate %154 by %c32_i32_40 dim 1 : vector<1x256xf32>, i32 -> vector<1x256xf32>
    %156 = arith.mulf %152, %136 : vector<1x256xf32>
    %157 = arith.addf %155, %156 : vector<1x256xf32>
    %c64_i32_41 = arith.constant 64 : i32
    %158 = tpu.dynamic_rotate %157 by %c64_i32_41 dim 1 : vector<1x256xf32>, i32 -> vector<1x256xf32>
    %159 = math.tanh %158 : vector<1x256xf32>
    %160 = arith.mulf %152, %159 : vector<1x256xf32>
    %161 = vector.extract_strided_slice %160 {offsets = [0, 96], sizes = [1, 32], strides = [1, 1]} : vector<1x256xf32> to vector<1x32xf32>
    %162 = vector.extract_strided_slice %160 {offsets = [0, 224], sizes = [1, 32], strides = [1, 1]} : vector<1x256xf32> to vector<1x32xf32>
    %163 = tpu.concatenate %161, %162 in 1 : vector<1x32xf32>, vector<1x32xf32> -> vector<1x64xf32>
    %164 = tpu.concatenate %100, %121, %142, %163 in 0 : vector<1x64xf32>, vector<1x64xf32>, vector<1x64xf32>, vector<1x64xf32> -> vector<4x64xf32>
    %165 = vector.extract_strided_slice %164 {offsets = [0, 32], sizes = [4, 32], strides = [1, 1]} : vector<4x64xf32> to vector<4x32xf32>
    %cst_42 = arith.constant dense<0.000000e+00> : vector<4x64xf32>
    %166 = tpu.matmul %165, %7, %cst_42 {dimension_numbers = #tpu.dot_dimension_numbers<[1], [0], [0], [1], [0, 0, 1, 1], [], []>} : vector<4x32xf32>, vector<32x64xf32>, vector<4x64xf32> -> vector<4x64xf32>
    %167 = vector.broadcast %3 : vector<1x64xf32> to vector<4x64xf32>
    %168 = arith.addf %166, %167 : vector<4x64xf32>
    %cst_43 = arith.constant 5.000000e-01 : f32
    %169 = vector.broadcast %cst_43 : f32 to vector<4x64xf32>
    %170 = arith.mulf %169, %168 : vector<4x64xf32>
    %cst_44 = arith.constant 0.707106769 : f32
    %171 = vector.broadcast %cst_44 : f32 to vector<4x64xf32>
    %172 = arith.mulf %168, %171 : vector<4x64xf32>
    %173 = math.erf %172 : vector<4x64xf32>
    %cst_45 = arith.constant 1.000000e+00 : f32
    %174 = vector.broadcast %cst_45 : f32 to vector<4x64xf32>
    %175 = arith.addf %174, %173 : vector<4x64xf32>
    %176 = arith.mulf %170, %175 : vector<4x64xf32>
    %cst_46 = arith.constant dense<0.000000e+00> : vector<4x5xf32>
    %177 = tpu.matmul %176, %8, %cst_46 {dimension_numbers = #tpu.dot_dimension_numbers<[1], [0], [0], [1], [0, 0, 1, 1], [], []>} : vector<4x64xf32>, vector<64x5xf32>, vector<4x5xf32> -> vector<4x5xf32>
    %178 = vector.broadcast %4 : vector<1x5xf32> to vector<4x5xf32>
    %179 = arith.addf %177, %178 : vector<4x5xf32>
    %c0_47 = arith.constant 0 : index
    %c0_48 = arith.constant 0 : index
    %180 = vector.load %arg2[%c0_47, %c0_48] : memref<4x5xf32, #tpu.memory_space<vmem>>, vector<4x5xf32>
    tpu.vector_store %arg2[%c0_47, %c0_48], %179 {strides = array<i32>} : memref<4x5xf32, #tpu.memory_space<vmem>>, vector<4x5xf32>,
    return
  }
}

</mosaic_0001>

<llo_original>
// kernel: cnn_lstm_forward.1
$region0: #{cnn_lstm_forward.1}
  #allocation0 [shape = 'u32[]', space=smem, size = 0x4, offset = 0x4, fixed_abs, tag = 'smem constant byte address 0x4 - core index']
  #allocation1 [shape = 'u32[144,128]{1,0:T(1,128)}', space=vmem, size = 0x12000, scoped, tag = 'internal scratch']
  %s0 = inlined_call_operand.hbm [shape: f32[4,16], index: 0, kind: input, shape index: {}]
  %s1 = inlined_call_operand.hbm [shape: f32[184,256], index: 1, kind: input, shape index: {}]
  %s2 = inlined_call_operand.hbm [shape: f32[4,5], index: 2, kind: output, shape index: {}]
  %s3 = sld [smem:[#allocation0]]
  $region26: #{cnn_lstm_forward.1} parent=0
    _
  %s5 = ssub.s32 1, %s3
  %s6 = scalar_select 0, %s5, %s3
  $region1: #{cnn_lstm_forward.1} parent=0
    #allocation2 [shape = 'u8[2048]{0}', space=vmem, size = 0x800, scoped, tag = 'input window, operand 0, single buffered']
    #allocation3 [shape = 's32[1]{0}', space=sflag, size = 0x4, scoped, tag = 'scoped memory for cnn_lstm_forward.1']
    #allocation4 [shape = 's32[1]{0}', space=sflag, size = 0x4, scoped, tag = 'scoped memory for cnn_lstm_forward.1']
    #allocation5 [shape = 'u8[188416]{0}', space=vmem, size = 0x2e000, scoped, tag = 'input window, operand 1, single buffered']
    #allocation6 [shape = 's32[1]{0}', space=sflag, size = 0x4, scoped, tag = 'scoped memory for cnn_lstm_forward.1']
    #allocation7 [shape = 'u8[2048]{0}', space=vmem, size = 0x800, scoped, tag = 'output window, operand 0, single buffered']
    %7 = vsyncpa [#allocation3], 0
    %8 = vsyncpa [#allocation6], 0
    %9 = vsyncpa [#allocation4], 0
    // Predicated region
    $region2: #{cnn_lstm_forward.1} parent=1 // pred_check
      _
    $region3: #{cnn_lstm_forward.1} parent=1 // pred_check_branch
      %11 = sbr.rel (0) target = $region5
    $region4: #{cnn_lstm_forward.1} parent=1 // pred_region
      %s13 = ssub.s32 64, 64
      %14 = vsyncadd [#allocation3], %s13
      %s16 = sshll.u32 [#allocation2], 4
      %s17 = int_to_ptr.vmem [resolvable:$true] %s16
      %19 = dma.hbm_to_vmem [thread:$0]  %s0, 64, %s17, [#allocation3]
    $region5: #{cnn_lstm_forward.1} parent=1 // pred_fallthru
      _
    // Predicated region
    $region6: #{cnn_lstm_forward.1} parent=1 // pred_check
      _
    $region7: #{cnn_lstm_forward.1} parent=1 // pred_check_branch
      %21 = sbr.rel (0) target = $region9
    $region8: #{cnn_lstm_forward.1} parent=1 // pred_region
      %s23 = ssub.s32 5888, 5888
      %24 = vsyncadd [#allocation6], %s23
      %s25 = sshll.u32 [#allocation5], 4
      %s26 = int_to_ptr.vmem [resolvable:$true] %s25
      %31 = dma.hbm_to_vmem [thread:$0]  %s1, 5888, %s26, [#allocation6], 256, 256, 16
    $region9: #{cnn_lstm_forward.1} parent=1 // pred_fallthru
      _
    // Predicated region
    $region10: #{cnn_lstm_forward.1} parent=1 // pred_check
      _
    $region11: #{cnn_lstm_forward.1} parent=1 // pred_check_branch
      %33 = sbr.rel (0) target = $region13
    $region12: #{cnn_lstm_forward.1} parent=1 // pred_region
      %34 = dma.done [#allocation3], 64
    $region13: #{cnn_lstm_forward.1} parent=1 // pred_fallthru
      _
    // Predicated region
    $region14: #{cnn_lstm_forward.1} parent=1 // pred_check
      _
    $region15: #{cnn_lstm_forward.1} parent=1 // pred_check_branch
      %36 = sbr.rel (0) target = $region17
    $region16: #{cnn_lstm_forward.1} parent=1 // pred_region
      %37 = dma.done [#allocation6], 5888
    $region17: #{cnn_lstm_forward.1} parent=1 // pred_fallthru
      _
    %v38 = vld [vmem:[#allocation5] sm:$0xf]
    %v39 = vld [vmem:[#allocation5 + $0x4] ss:$0 sm:$0xff]
    %s40 = scalar_lea.vmem [#allocation5], 5
    %v41 = vld [vmem:[%s40] ss:$8 sm:$0x3]
    %v42 = vld [vmem:[#allocation5 + $0x6] ss:$0 sm:$0xff]
    %v43 = vld [vmem:[#allocation5 + $0x7] ss:$0 sm:$0xff]
    %v44 = vld [vmem:[#allocation5 + $0x10] sm:$0xff]
    %v45 = vld [vmem:[#allocation5 + $0x18] sm:$0xff]
    %v46 = vld [vmem:[#allocation5 + $0x20] sm:$0xff]
    %v47 = vld [vmem:[#allocation5 + $0x28] sm:$0xff]
    %v48 = vld [vmem:[#allocation5 + $0x30] sm:$0xff]
    %v49 = vld [vmem:[#allocation5 + $0x38] sm:$0xff]
    %v50 = vld [vmem:[#allocation5 + $0x40] sm:$0xff]
    %v51 = vld [vmem:[#allocation5 + $0x48] sm:$0xff]
    %v52 = vld [vmem:[#allocation5 + $0x50] sm:$0xff]
    %v53 = vld [vmem:[#allocation5 + $0x58] sm:$0xff]
    %v54 = vld [vmem:[#allocation5 + $0x60] sm:$0xff]
    %v55 = vld [vmem:[#allocation5 + $0x68] sm:$0xff]
    %v56 = vld [vmem:[#allocation5 + $0x70] sm:$0xff]
    %v57 = vld [vmem:[#allocation5 + $0x78] sm:$0xff]
    %v58 = vld [vmem:[#allocation5 + $0x80] sm:$0xff]
    %v59 = vld [vmem:[#allocation5 + $0x88] sm:$0xff]
    %v60 = vld [vmem:[#allocation5 + $0x90] sm:$0xff]
    %v61 = vld [vmem:[#allocation5 + $0x98] sm:$0xff]
    %v62 = vld [vmem:[#allocation5 + $0xa0] sm:$0xff]
    %v63 = vld [vmem:[#allocation5 + $0xa8] sm:$0xff]
    %v64 = vld [vmem:[#allocation5 + $0xb0] sm:$0xff]
    %v65 = vld [vmem:[#allocation5 + $0xc0] sm:$0xff]
    %v66 = vld [vmem:[#allocation5 + $0xd0] sm:$0xff]
    %v67 = vld [vmem:[#allocation5 + $0xe0] sm:$0xff]
    %v68 = vld [vmem:[#allocation5 + $0xf0] sm:$0xff]
    %v69 = vld [vmem:[#allocation5 + $0x100] sm:$0xff]
    %v70 = vld [vmem:[#allocation5 + $0x110] sm:$0xff]
    %v71 = vld [vmem:[#allocation5 + $0x120] sm:$0xff]
    %v72 = vld [vmem:[#allocation5 + $0x130] sm:$0xff]
    %v73 = vld [vmem:[#allocation5 + $0x140] sm:$0xff]
    %v74 = vld [vmem:[#allocation5 + $0x150] sm:$0xff]
    %v75 = vld [vmem:[#allocation5 + $0x160] sm:$0xff]
    %v76 = vld [vmem:[#allocation2] sm:$0xf]
    %78 = vrot.lane.b32.xlu0 %v76, 116
    %v79 = vpop.permute.xlu0 %78
    %vm80 = vcmask 31744
    %v81 = vsel %vm80, %v79, 0
    %vm83 = vcmask 1043456
    %v85 = vsel %vm83, %v38, 0
    %87 = vmatprep.subr.mxu0 0.0
    %88 = vmatpush1.msra.mxu0 %v85
    %89 = vmatprep.subr.mxu0 0.0
    %90 = vmatpush1.msra.mxu0 0.0
    %91 = vmatprep.subr.mxu0 0.0
    %92 = vmatpush1.msra.mxu0 0.0
    %93 = vmatprep.subr.mxu0 0.0
    %94 = vmatpush1.msra.mxu0 0.0
    %95 = vmatprep.subr.mxu0 0.0
    %96 = vmatpush1.msra.mxu0 0.0
    %97 = vmatprep.subr.mxu0 0.0
    %98 = vmatpush1.msra.mxu0 0.0
    %99 = vmatprep.subr.mxu0 0.0
    %100 = vmatpush1.msra.mxu0 0.0
    %101 = vmatprep.subr.mxu0 0.0
    %102 = vmatpush1.msra.mxu0 0.0
    %103 = vmatprep.subr.mxu0 0.0
    %104 = vmatpush1.msra.mxu0 0.0
    %105 = vmatprep.subr.mxu0 0.0
    %106 = vmatpush1.msra.mxu0 0.0
    %107 = vmatprep.subr.mxu0 0.0
    %108 = vmatpush1.msra.mxu0 0.0
    %109 = vmatprep.subr.mxu0 0.0
    %110 = vmatpush1.msra.mxu0 0.0
    %111 = vmatprep.subr.mxu0 0.0
    %112 = vmatpush1.msra.mxu0 0.0
    %113 = vmatprep.subr.mxu0 0.0
    %114 = vmatpush1.msra.mxu0 0.0
    %115 = vmatprep.subr.mxu0 0.0
    %116 = vmatpush1.msra.mxu0 0.0
    %117 = vmatprep.subr.mxu0 0.0
    %118 = vmatpush1.msra.mxu0 0.0
    %119 = vmatprep.subr.mxu0 0.0
    %120 = vmatpush1.msra.mxu0 0.0
    %121 = vmatprep.subr.mxu0 0.0
    %122 = vmatpush1.msra.mxu0 0.0
    %123 = vmatprep.subr.mxu0 0.0
    %124 = vmatpush1.msra.mxu0 0.0
    %125 = vmatprep.subr.mxu0 0.0
    %126 = vmatpush1.msra.mxu0 0.0
    %127 = vmatprep.subr.mxu0 0.0
    %128 = vmatpush1.msra.mxu0 0.0
    %129 = vmatprep.subr.mxu0 0.0
    %130 = vmatpush1.msra.mxu0 0.0
    %131 = vmatprep.subr.mxu0 0.0
    %132 = vmatpush1.msra.mxu0 0.0
    %133 = vmatprep.subr.mxu0 0.0
    %134 = vmatpush1.msra.mxu0 0.0
    %135 = vmatprep.subr.mxu0 0.0
    %136 = vmatpush1.msra.mxu0 0.0
    %137 = vmatprep.subr.mxu0 0.0
    %138 = vmatpush1.msra.mxu0 0.0
    %139 = vmatprep.subr.mxu0 0.0
    %140 = vmatpush1.msra.mxu0 0.0
    %141 = vmatprep.subr.mxu0 0.0
    %142 = vmatpush1.msra.mxu0 0.0
    %143 = vmatprep.subr.mxu0 0.0
    %144 = vmatpush1.msra.mxu0 0.0
    %145 = vmatprep.subr.mxu0 0.0
    %146 = vmatpush1.msra.mxu0 0.0
    %147 = vmatprep.subr.mxu0 0.0
    %148 = vmatpush1.msra.mxu0 0.0
    %149 = vmatprep.subr.mxu0 0.0
    %150 = vmatpush1.msra.mxu0 0.0
    %151 = vmatprep.mubr.f32.mxu0 0.0
    %152 = vmatmul.mubr.f32.gmra.mrb[0].mxu0 %v81
    %v153 = vpop.f32.mrb[0].mxu0
    %v154 = vadd.f32 %v39, %v153
    %v155 = vpop.f32.mrb[0].mxu0
    %156 = vdwg.mxu0
    %v157 = vmul.f32 %v154, 0.5
    %v158 = vmul.f32 %v154, 0.70710677
    %v159 = verf.f32.pop %v158
    %v160 = vadd.f32 %v159, 1.0
    %v161 = vmul.f32 %v157, %v160
    %163 = vrot.lane.b32.xlu0 %v161, 112
    %v164 = vpop.permute.xlu0 %163
    %v166 = vmax.f32 %v161, %v164
    %v168 = vlaneseq
    %v169 = vshrl.u32 %v168, 7
    %v170 = vsub.s32 0, %v169
    %v171 = vrot.slane %v41, %v170
    %v172 = vlaneseq
    %v173 = vshrl.u32 %v172, 7
    %v174 = vsub.s32 1, %v173
    %v175 = vrot.slane %v41, %v174
    %vm178 = vcmask 130048
    %v180 = vsel %vm178, %v166, 0
    %182 = vmatprep.subr.mxu0 %v45
    %183 = vmatpush1.msra.mxu0 %v44
    %184 = vmatprep.subr.mxu0 %v47
    %185 = vmatpush1.msra.mxu0 %v46
    %186 = vmatprep.subr.mxu0 0.0
    %187 = vmatpush1.msra.mxu0 0.0
    %188 = vmatprep.subr.mxu0 0.0
    %189 = vmatpush1.msra.mxu0 0.0
    %190 = vmatprep.subr.mxu0 0.0
    %191 = vmatpush1.msra.mxu0 0.0
    %192 = vmatprep.subr.mxu0 0.0
    %193 = vmatpush1.msra.mxu0 0.0
    %194 = vmatprep.subr.mxu0 0.0
    %195 = vmatpush1.msra.mxu0 0.0
    %196 = vmatprep.subr.mxu0 0.0
    %197 = vmatpush1.msra.mxu0 0.0
    %198 = vmatprep.subr.mxu0 0.0
    %199 = vmatpush1.msra.mxu0 0.0
    %200 = vmatprep.subr.mxu0 0.0
    %201 = vmatpush1.msra.mxu0 0.0
    %202 = vmatprep.subr.mxu0 0.0
    %203 = vmatpush1.msra.mxu0 0.0
    %204 = vmatprep.subr.mxu0 0.0
    %205 = vmatpush1.msra.mxu0 0.0
    %206 = vmatprep.subr.mxu0 0.0
    %207 = vmatpush1.msra.mxu0 0.0
    %208 = vmatprep.subr.mxu0 0.0
    %209 = vmatpush1.msra.mxu0 0.0
    %210 = vmatprep.subr.mxu0 0.0
    %211 = vmatpush1.msra.mxu0 0.0
    %212 = vmatprep.subr.mxu0 0.0
    %213 = vmatpush1.msra.mxu0 0.0
    %214 = vmatprep.subr.mxu0 0.0
    %215 = vmatpush1.msra.mxu0 0.0
    %216 = vmatprep.subr.mxu0 0.0
    %217 = vmatpush1.msra.mxu0 0.0
    %218 = vmatprep.subr.mxu0 0.0
    %219 = vmatpush1.msra.mxu0 0.0
    %220 = vmatprep.subr.mxu0 0.0
    %221 = vmatpush1.msra.mxu0 0.0
    %222 = vmatprep.subr.mxu0 0.0
    %223 = vmatpush1.msra.mxu0 0.0
    %224 = vmatprep.subr.mxu0 0.0
    %225 = vmatpush1.msra.mxu0 0.0
    %226 = vmatprep.subr.mxu0 0.0
    %227 = vmatpush1.msra.mxu0 0.0
    %228 = vmatprep.subr.mxu0 0.0
    %229 = vmatpush1.msra.mxu0 0.0
    %230 = vmatprep.subr.mxu0 0.0
    %231 = vmatpush1.msra.mxu0 0.0
    %232 = vmatprep.subr.mxu0 0.0
    %233 = vmatpush1.msra.mxu0 0.0
    %234 = vmatprep.subr.mxu0 0.0
    %235 = vmatpush1.msra.mxu0 0.0
    %236 = vmatprep.subr.mxu0 0.0
    %237 = vmatpush1.msra.mxu0 0.0
    %238 = vmatprep.subr.mxu0 0.0
    %239 = vmatpush1.msra.mxu0 0.0
    %240 = vmatprep.subr.mxu0 0.0
    %241 = vmatpush1.msra.mxu0 0.0
    %242 = vmatprep.subr.mxu0 0.0
    %243 = vmatpush1.msra.mxu0 0.0
    %244 = vmatprep.subr.mxu0 0.0
    %245 = vmatpush1.msra.mxu0 0.0
    %246 = vmatprep.mubr.f32.mxu0 0.0
    %247 = vmatmul.mubr.f32.gmra.mrb[0].mxu0 %v180
    %v248 = vpop.f32.mrb[0].mxu0
    %v249 = vadd.f32 %v171, %v248
    %v250 = vpop.f32.mrb[0].mxu0
    %v251 = vadd.f32 %v175, %v250
    %252 = vdwg.mxu0
    %v253 = vlaneseq
    %v254 = vand.u32 %v253, 127
    %v255 = vadd.s32 %v254, 128
    %vm256 = vcmp.lt.s32.totalorder %v254, 0
    %v257 = vsub.s32 0, %v254
    %v258 = vsel %vm256, %v257, %v254
    %v259 = vshrl.u32 %v258, 7
    %v260 = vand.u32 %v258, 127
    %v261 = vsub.s32 0, %v260
    %v262 = vsel %vm256, %v261, %v260
    %vm263 = vcmp.lt.s32.totalorder %v255, 0
    %v264 = vsub.s32 0, %v255
    %v265 = vsel %vm263, %v264, %v255
    %v266 = vshrl.u32 %v265, 7
    %v267 = vand.u32 %v265, 127
    %v268 = vsub.s32 0, %v267
    %v269 = vsel %vm263, %v268, %v267
    %vm270 = vcmp.ne.s32.totalorder %v262, 0
    %vm271 = vcmp.ne.s32.totalorder %v269, 0
    %vm272 = vcmp.lt.s32.totalorder %v262, 0
    %vm273 = vcmp.lt.s32.totalorder %v269, 0
    %vm274 = vmand %vm272, %vm270
    %vm275 = vmand %vm273, %vm271
    %v276 = vadd.s32 %v262, 128
    %v277 = vadd.s32 %v269, 128
    %v278 = vsel %vm274, %v276, %v262
    %v279 = vsel %vm275, %v277, %v269
    %vm280 = vcmp.ge.s32.totalorder %v278, 64
    %vm281 = vcmp.ge.s32.totalorder %v279, 64
    %vm282 = vcmp.lt.s32.totalorder %v278, 96
    %vm283 = vcmp.lt.s32.totalorder %v279, 96
    %vm284 = vmand %vm280, %vm282
    %vm285 = vmand %vm281, %vm283
    %vm286 = vcmp.lt.s32.totalorder %v254, 128
    %vm287 = vcmp.lt.s32.totalorder %v255, 128
    %v288 = vsel %vm286, 1, 0
    %v289 = vsel %vm287, 1, 0
    %v290 = vcvt.s32.f32 %v288
    %v291 = vcvt.s32.f32 %v289
    %vm292 = vcmp.lt.s32.totalorder %v254, 32
    %v293 = vsel %vm292, 1, 0
    %v294 = vcvt.s32.f32 %v293
    %v295 = vtanh.pop %v249
    %v296 = vtanh.pop %v251
    %v297 = vxor.u32 %v249, 2147483648
    %v298 = vxor.u32 %v251, 2147483648
    %v299 = vmul.f32 %v297, 1.442695
    %v300 = vpow.pop %v299
    %v301 = vmul.f32 %v298, 1.442695
    %v302 = vpow.pop %v301
    %v303 = vadd.f32 %v300, 1.0
    %v304 = vadd.f32 %v302, 1.0
    %v305 = vrcp.pop %v303
    %v306 = vmul.f32 1.0, %v305
    %v307 = vrcp.pop %v304
    %v308 = vmul.f32 1.0, %v307
    %v309 = vsel %vm284, %v295, %v306
    %v310 = vsel %vm285, %v296, %v308
    %311 = vrot.lane.b32.xlu0 %v309, 64
    %v312 = vpop.permute.xlu0 %311
    %313 = vrot.lane.b32.xlu0 %v310, 64
    %v314 = vpop.permute.xlu0 %313
    %vm315 = vcmp.lt.s32.totalorder %v254, 64
    %v316 = vsel %vm315, %v312, %v314
    %v317 = vsel %vm315, %v314, %v312
    %v318 = vmul.f32 %v309, %v316
    %v319 = vmul.f32 %v310, %v317
    %320 = vrot.lane.b32.xlu0 %v318, 32
    %v321 = vpop.permute.xlu0 %320
    %322 = vrot.lane.b32.xlu0 %v319, 32
    %v323 = vpop.permute.xlu0 %322
    %v324 = vsel %vm292, %v321, %v323
    %v325 = vsel %vm292, %v323, %v321
    %v326 = vmul.f32 %v309, 0.0
    %v327 = vmul.f32 %v310, 0.0
    %v328 = vadd.f32 %v325, %v326
    %v329 = vadd.f32 %v324, %v327
    %330 = vrot.lane.b32.xlu0 %v328, 64
    %v331 = vpop.permute.xlu0 %330
    %332 = vrot.lane.b32.xlu0 %v329, 64
    %v333 = vpop.permute.xlu0 %332
    %v334 = vsel %vm315, %v331, %v333
    %v335 = vsel %vm315, %v333, %v331
    %v336 = vtanh.pop %v335
    %v337 = vtanh.pop %v334
    %v338 = vmul.f32 %v309, %v336
    %v339 = vmul.f32 %v310, %v337
    %341 = vrot.lane.b32.xlu0 %v338, 32
    %v342 = vpop.permute.xlu0 %341
    %345 = vrot.lane.b32.xlu0 %v339, 64
    %v346 = vpop.permute.xlu0 %345
    %vm348 = vcmask 261120
    %v349 = vsel %vm348, %v342, %v346
    %v350 = vmul.f32 %v328, %v290
    %v351 = vmul.f32 %v329, %v291
    %v352 = vmul.f32 %v349, %v294
    %v355 = vrot.slane %v249, 1
    %v356 = vrot.slane %v251, 1
    %vm359 = vcmask 523264
    %v361 = vsel %vm359, %v352, 0
    %363 = vmatprep.subr.mxu0 %v49
    %364 = vmatpush1.msra.mxu0 %v48
    %365 = vmatprep.subr.mxu0 %v51
    %366 = vmatpush1.msra.mxu0 %v50
    %367 = vmatprep.subr.mxu0 %v53
    %368 = vmatpush1.msra.mxu0 %v52
    %369 = vmatprep.subr.mxu0 %v55
    %370 = vmatpush1.msra.mxu0 %v54
    %371 = vmatprep.subr.mxu0 %v57
    %372 = vmatpush1.msra.mxu0 %v56
    %373 = vmatprep.subr.mxu0 %v59
    %374 = vmatpush1.msra.mxu0 %v58
    %375 = vmatprep.subr.mxu0 %v61
    %376 = vmatpush1.msra.mxu0 %v60
    %377 = vmatprep.subr.mxu0 %v63
    %378 = vmatpush1.msra.mxu0 %v62
    %379 = vmatprep.subr.mxu0 0.0
    %380 = vmatpush1.msra.mxu0 0.0
    %381 = vmatprep.subr.mxu0 0.0
    %382 = vmatpush1.msra.mxu0 0.0
    %383 = vmatprep.subr.mxu0 0.0
    %384 = vmatpush1.msra.mxu0 0.0
    %385 = vmatprep.subr.mxu0 0.0
    %386 = vmatpush1.msra.mxu0 0.0
    %387 = vmatprep.subr.mxu0 0.0
    %388 = vmatpush1.msra.mxu0 0.0
    %389 = vmatprep.subr.mxu0 0.0
    %390 = vmatpush1.msra.mxu0 0.0
    %391 = vmatprep.subr.mxu0 0.0
    %392 = vmatpush1.msra.mxu0 0.0
    %393 = vmatprep.subr.mxu0 0.0
    %394 = vmatpush1.msra.mxu0 0.0
    %395 = vmatprep.subr.mxu0 0.0
    %396 = vmatpush1.msra.mxu0 0.0
    %397 = vmatprep.subr.mxu0 0.0
    %398 = vmatpush1.msra.mxu0 0.0
    %399 = vmatprep.subr.mxu0 0.0
    %400 = vmatpush1.msra.mxu0 0.0
    %401 = vmatprep.subr.mxu0 0.0
    %402 = vmatpush1.msra.mxu0 0.0
    %403 = vmatprep.subr.mxu0 0.0
    %404 = vmatpush1.msra.mxu0 0.0
    %405 = vmatprep.subr.mxu0 0.0
    %406 = vmatpush1.msra.mxu0 0.0
    %407 = vmatprep.subr.mxu0 0.0
    %408 = vmatpush1.msra.mxu0 0.0
    %409 = vmatprep.subr.mxu0 0.0
    %410 = vmatpush1.msra.mxu0 0.0
    %411 = vmatprep.subr.mxu0 0.0
    %412 = vmatpush1.msra.mxu0 0.0
    %413 = vmatprep.subr.mxu0 0.0
    %414 = vmatpush1.msra.mxu0 0.0
    %415 = vmatprep.subr.mxu0 0.0
    %416 = vmatpush1.msra.mxu0 0.0
    %417 = vmatprep.subr.mxu0 0.0
    %418 = vmatpush1.msra.mxu0 0.0
    %419 = vmatprep.subr.mxu0 0.0
    %420 = vmatpush1.msra.mxu0 0.0
    %421 = vmatprep.subr.mxu0 0.0
    %422 = vmatpush1.msra.mxu0 0.0
    %423 = vmatprep.subr.mxu0 0.0
    %424 = vmatpush1.msra.mxu0 0.0
    %425 = vmatprep.subr.mxu0 0.0
    %426 = vmatpush1.msra.mxu0 0.0
    %427 = vmatprep.mubr.f32.mxu0 0.0
    %428 = vmatmul.mubr.f32.gmra.mrb[0].mxu0 %v361
    %v429 = vpop.f32.mrb[0].mxu0
    %v430 = vadd.f32 %v355, %v429
    %v431 = vpop.f32.mrb[0].mxu0
    %v432 = vadd.f32 %v356, %v431
    %433 = vdwg.mxu0
    %v434 = vtanh.pop %v430
    %v435 = vtanh.pop %v432
    %v436 = vxor.u32 %v430, 2147483648
    %v437 = vxor.u32 %v432, 2147483648
    %v438 = vmul.f32 %v436, 1.442695
    %v439 = vpow.pop %v438
    %v440 = vmul.f32 %v437, 1.442695
    %v441 = vpow.pop %v440
    %v442 = vadd.f32 %v439, 1.0
    %v443 = vadd.f32 %v441, 1.0
    %v444 = vrcp.pop %v442
    %v445 = vmul.f32 1.0, %v444
    %v446 = vrcp.pop %v443
    %v447 = vmul.f32 1.0, %v446
    %v448 = vsel %vm284, %v434, %v445
    %v449 = vsel %vm285, %v435, %v447
    %450 = vrot.lane.b32.xlu0 %v448, 64
    %v451 = vpop.permute.xlu0 %450
    %452 = vrot.lane.b32.xlu0 %v449, 64
    %v453 = vpop.permute.xlu0 %452
    %v454 = vsel %vm315, %v451, %v453
    %v455 = vsel %vm315, %v453, %v451
    %v456 = vmul.f32 %v448, %v454
    %v457 = vmul.f32 %v449, %v455
    %458 = vrot.lane.b32.xlu0 %v456, 32
    %v459 = vpop.permute.xlu0 %458
    %460 = vrot.lane.b32.xlu0 %v457, 32
    %v461 = vpop.permute.xlu0 %460
    %v462 = vsel %vm292, %v459, %v461
    %v463 = vsel %vm292, %v461, %v459
    %v464 = vmul.f32 %v448, %v350
    %v465 = vmul.f32 %v449, %v351
    %v466 = vadd.f32 %v463, %v464
    %v467 = vadd.f32 %v462, %v465
    %468 = vrot.lane.b32.xlu0 %v466, 64
    %v469 = vpop.permute.xlu0 %468
    %470 = vrot.lane.b32.xlu0 %v467, 64
    %v471 = vpop.permute.xlu0 %470
    %v472 = vsel %vm315, %v469, %v471
    %v473 = vsel %vm315, %v471, %v469
    %v474 = vtanh.pop %v473
    %v475 = vtanh.pop %v472
    %v476 = vmul.f32 %v448, %v474
    %v477 = vmul.f32 %v449, %v475
    %479 = vrot.lane.b32.xlu0 %v476, 32
    %v480 = vpop.permute.xlu0 %479
    %483 = vrot.lane.b32.xlu0 %v477, 64
    %v484 = vpop.permute.xlu0 %483
    %v486 = vsel %vm348, %v480, %v484
    %v487 = vrot.slane %v249, 2
    %v488 = vrot.slane %v251, 2
    %v492 = vsel %vm359, %v486, 0
    %494 = vmatprep.subr.mxu0 %v49
    %495 = vmatpush1.msra.mxu0 %v48
    %496 = vmatprep.subr.mxu0 %v51
    %497 = vmatpush1.msra.mxu0 %v50
    %498 = vmatprep.subr.mxu0 %v53
    %499 = vmatpush1.msra.mxu0 %v52
    %500 = vmatprep.subr.mxu0 %v55
    %501 = vmatpush1.msra.mxu0 %v54
    %502 = vmatprep.subr.mxu0 %v57
    %503 = vmatpush1.msra.mxu0 %v56
    %504 = vmatprep.subr.mxu0 %v59
    %505 = vmatpush1.msra.mxu0 %v58
    %506 = vmatprep.subr.mxu0 %v61
    %507 = vmatpush1.msra.mxu0 %v60
    %508 = vmatprep.subr.mxu0 %v63
    %509 = vmatpush1.msra.mxu0 %v62
    %510 = vmatprep.subr.mxu0 0.0
    %511 = vmatpush1.msra.mxu0 0.0
    %512 = vmatprep.subr.mxu0 0.0
    %513 = vmatpush1.msra.mxu0 0.0
    %514 = vmatprep.subr.mxu0 0.0
    %515 = vmatpush1.msra.mxu0 0.0
    %516 = vmatprep.subr.mxu0 0.0
    %517 = vmatpush1.msra.mxu0 0.0
    %518 = vmatprep.subr.mxu0 0.0
    %519 = vmatpush1.msra.mxu0 0.0
    %520 = vmatprep.subr.mxu0 0.0
    %521 = vmatpush1.msra.mxu0 0.0
    %522 = vmatprep.subr.mxu0 0.0
    %523 = vmatpush1.msra.mxu0 0.0
    %524 = vmatprep.subr.mxu0 0.0
    %525 = vmatpush1.msra.mxu0 0.0
    %526 = vmatprep.subr.mxu0 0.0
    %527 = vmatpush1.msra.mxu0 0.0
    %528 = vmatprep.subr.mxu0 0.0
    %529 = vmatpush1.msra.mxu0 0.0
    %530 = vmatprep.subr.mxu0 0.0
    %531 = vmatpush1.msra.mxu0 0.0
    %532 = vmatprep.subr.mxu0 0.0
    %533 = vmatpush1.msra.mxu0 0.0
    %534 = vmatprep.subr.mxu0 0.0
    %535 = vmatpush1.msra.mxu0 0.0
    %536 = vmatprep.subr.mxu0 0.0
    %537 = vmatpush1.msra.mxu0 0.0
    %538 = vmatprep.subr.mxu0 0.0
    %539 = vmatpush1.msra.mxu0 0.0
    %540 = vmatprep.subr.mxu0 0.0
    %541 = vmatpush1.msra.mxu0 0.0
    %542 = vmatprep.subr.mxu0 0.0
    %543 = vmatpush1.msra.mxu0 0.0
    %544 = vmatprep.subr.mxu0 0.0
    %545 = vmatpush1.msra.mxu0 0.0
    %546 = vmatprep.subr.mxu0 0.0
    %547 = vmatpush1.msra.mxu0 0.0
    %548 = vmatprep.subr.mxu0 0.0
    %549 = vmatpush1.msra.mxu0 0.0
    %550 = vmatprep.subr.mxu0 0.0
    %551 = vmatpush1.msra.mxu0 0.0
    %552 = vmatprep.subr.mxu0 0.0
    %553 = vmatpush1.msra.mxu0 0.0
    %554 = vmatprep.subr.mxu0 0.0
    %555 = vmatpush1.msra.mxu0 0.0
    %556 = vmatprep.subr.mxu0 0.0
    %557 = vmatpush1.msra.mxu0 0.0
    %558 = vmatprep.mubr.f32.mxu0 0.0
    %559 = vmatmul.mubr.f32.gmra.mrb[0].mxu0 %v492
    %v560 = vpop.f32.mrb[0].mxu0
    %v561 = vadd.f32 %v487, %v560
    %v562 = vpop.f32.mrb[0].mxu0
    %v563 = vadd.f32 %v488, %v562
    %564 = vdwg.mxu0
    %v565 = vtanh.pop %v561
    %v566 = vtanh.pop %v563
    %v567 = vxor.u32 %v561, 2147483648
    %v568 = vxor.u32 %v563, 2147483648
    %v569 = vmul.f32 %v567, 1.442695
    %v570 = vpow.pop %v569
    %v571 = vmul.f32 %v568, 1.442695
    %v572 = vpow.pop %v571
    %v573 = vadd.f32 %v570, 1.0
    %v574 = vadd.f32 %v572, 1.0
    %v575 = vrcp.pop %v573
    %v576 = vmul.f32 1.0, %v575
    %v577 = vrcp.pop %v574
    %v578 = vmul.f32 1.0, %v577
    %v579 = vsel %vm284, %v565, %v576
    %v580 = vsel %vm285, %v566, %v578
    %581 = vrot.lane.b32.xlu0 %v579, 64
    %v582 = vpop.permute.xlu0 %581
    %583 = vrot.lane.b32.xlu0 %v580, 64
    %v584 = vpop.permute.xlu0 %583
    %v585 = vsel %vm315, %v582, %v584
    %v586 = vsel %vm315, %v584, %v582
    %v587 = vmul.f32 %v579, %v585
    %v588 = vmul.f32 %v580, %v586
    %589 = vrot.lane.b32.xlu0 %v587, 32
    %v590 = vpop.permute.xlu0 %589
    %591 = vrot.lane.b32.xlu0 %v588, 32
    %v592 = vpop.permute.xlu0 %591
    %v593 = vsel %vm292, %v590, %v592
    %v594 = vsel %vm292, %v592, %v590
    %v595 = vmul.f32 %v579, %v466
    %v596 = vmul.f32 %v580, %v467
    %v597 = vadd.f32 %v594, %v595
    %v598 = vadd.f32 %v593, %v596
    %599 = vrot.lane.b32.xlu0 %v597, 64
    %v600 = vpop.permute.xlu0 %599
    %601 = vrot.lane.b32.xlu0 %v598, 64
    %v602 = vpop.permute.xlu0 %601
    %v603 = vsel %vm315, %v600, %v602
    %v604 = vsel %vm315, %v602, %v600
    %v605 = vtanh.pop %v604
    %v606 = vtanh.pop %v603
    %v607 = vmul.f32 %v579, %v605
    %v608 = vmul.f32 %v580, %v606
    %610 = vrot.lane.b32.xlu0 %v607, 32
    %v611 = vpop.permute.xlu0 %610
    %614 = vrot.lane.b32.xlu0 %v608, 64
    %v615 = vpop.permute.xlu0 %614
    %v617 = vsel %vm348, %v611, %v615
    %v618 = vrot.slane %v249, 3
    %v619 = vrot.slane %v251, 3
    %v623 = vsel %vm359, %v617, 0
    %625 = vmatprep.subr.mxu0 %v49
    %626 = vmatpush1.msra.mxu0 %v48
    %627 = vmatprep.subr.mxu0 %v51
    %628 = vmatpush1.msra.mxu0 %v50
    %629 = vmatprep.subr.mxu0 %v53
    %630 = vmatpush1.msra.mxu0 %v52
    %631 = vmatprep.subr.mxu0 %v55
    %632 = vmatpush1.msra.mxu0 %v54
    %633 = vmatprep.subr.mxu0 %v57
    %634 = vmatpush1.msra.mxu0 %v56
    %635 = vmatprep.subr.mxu0 %v59
    %636 = vmatpush1.msra.mxu0 %v58
    %637 = vmatprep.subr.mxu0 %v61
    %638 = vmatpush1.msra.mxu0 %v60
    %639 = vmatprep.subr.mxu0 %v63
    %640 = vmatpush1.msra.mxu0 %v62
    %641 = vmatprep.subr.mxu0 0.0
    %642 = vmatpush1.msra.mxu0 0.0
    %643 = vmatprep.subr.mxu0 0.0
    %644 = vmatpush1.msra.mxu0 0.0
    %645 = vmatprep.subr.mxu0 0.0
    %646 = vmatpush1.msra.mxu0 0.0
    %647 = vmatprep.subr.mxu0 0.0
    %648 = vmatpush1.msra.mxu0 0.0
    %649 = vmatprep.subr.mxu0 0.0
    %650 = vmatpush1.msra.mxu0 0.0
    %651 = vmatprep.subr.mxu0 0.0
    %652 = vmatpush1.msra.mxu0 0.0
    %653 = vmatprep.subr.mxu0 0.0
    %654 = vmatpush1.msra.mxu0 0.0
    %655 = vmatprep.subr.mxu0 0.0
    %656 = vmatpush1.msra.mxu0 0.0
    %657 = vmatprep.subr.mxu0 0.0
    %658 = vmatpush1.msra.mxu0 0.0
    %659 = vmatprep.subr.mxu0 0.0
    %660 = vmatpush1.msra.mxu0 0.0
    %661 = vmatprep.subr.mxu0 0.0
    %662 = vmatpush1.msra.mxu0 0.0
    %663 = vmatprep.subr.mxu0 0.0
    %664 = vmatpush1.msra.mxu0 0.0
    %665 = vmatprep.subr.mxu0 0.0
    %666 = vmatpush1.msra.mxu0 0.0
    %667 = vmatprep.subr.mxu0 0.0
    %668 = vmatpush1.msra.mxu0 0.0
    %669 = vmatprep.subr.mxu0 0.0
    %670 = vmatpush1.msra.mxu0 0.0
    %671 = vmatprep.subr.mxu0 0.0
    %672 = vmatpush1.msra.mxu0 0.0
    %673 = vmatprep.subr.mxu0 0.0
    %674 = vmatpush1.msra.mxu0 0.0
    %675 = vmatprep.subr.mxu0 0.0
    %676 = vmatpush1.msra.mxu0 0.0
    %677 = vmatprep.subr.mxu0 0.0
    %678 = vmatpush1.msra.mxu0 0.0
    %679 = vmatprep.subr.mxu0 0.0
    %680 = vmatpush1.msra.mxu0 0.0
    %681 = vmatprep.subr.mxu0 0.0
    %682 = vmatpush1.msra.mxu0 0.0
    %683 = vmatprep.subr.mxu0 0.0
    %684 = vmatpush1.msra.mxu0 0.0
    %685 = vmatprep.subr.mxu0 0.0
    %686 = vmatpush1.msra.mxu0 0.0
    %687 = vmatprep.subr.mxu0 0.0
    %688 = vmatpush1.msra.mxu0 0.0
    %689 = vmatprep.mubr.f32.mxu0 0.0
    %690 = vmatmul.mubr.f32.gmra.mrb[0].mxu0 %v623
    %v691 = vpop.f32.mrb[0].mxu0
    %v692 = vadd.f32 %v618, %v691
    %v693 = vpop.f32.mrb[0].mxu0
    %v694 = vadd.f32 %v619, %v693
    %695 = vdwg.mxu0
    %v696 = vtanh.pop %v692
    %v697 = vtanh.pop %v694
    %v698 = vxor.u32 %v692, 2147483648
    %v699 = vxor.u32 %v694, 2147483648
    %v700 = vmul.f32 %v698, 1.442695
    %v701 = vpow.pop %v700
    %v702 = vmul.f32 %v699, 1.442695
    %v703 = vpow.pop %v702
    %v704 = vadd.f32 %v701, 1.0
    %v705 = vadd.f32 %v703, 1.0
    %v706 = vrcp.pop %v704
    %v707 = vmul.f32 1.0, %v706
    %v708 = vrcp.pop %v705
    %v709 = vmul.f32 1.0, %v708
    %v710 = vsel %vm284, %v696, %v707
    %v711 = vsel %vm285, %v697, %v709
    %712 = vrot.lane.b32.xlu0 %v710, 64
    %v713 = vpop.permute.xlu0 %712
    %714 = vrot.lane.b32.xlu0 %v711, 64
    %v715 = vpop.permute.xlu0 %714
    %v716 = vsel %vm315, %v713, %v715
    %v717 = vsel %vm315, %v715, %v713
    %v718 = vmul.f32 %v710, %v716
    %v719 = vmul.f32 %v711, %v717
    %720 = vrot.lane.b32.xlu0 %v718, 32
    %v721 = vpop.permute.xlu0 %720
    %722 = vrot.lane.b32.xlu0 %v719, 32
    %v723 = vpop.permute.xlu0 %722
    %v724 = vsel %vm292, %v721, %v723
    %v725 = vsel %vm292, %v723, %v721
    %v726 = vmul.f32 %v710, %v597
    %v727 = vmul.f32 %v711, %v598
    %v728 = vadd.f32 %v725, %v726
    %v729 = vadd.f32 %v724, %v727
    %730 = vrot.lane.b32.xlu0 %v728, 64
    %v731 = vpop.permute.xlu0 %730
    %732 = vrot.lane.b32.xlu0 %v729, 64
    %v733 = vpop.permute.xlu0 %732
    %v734 = vsel %vm315, %v731, %v733
    %v735 = vsel %vm315, %v733, %v731
    %v736 = vtanh.pop %v735
    %v737 = vtanh.pop %v734
    %v738 = vmul.f32 %v710, %v736
    %v739 = vmul.f32 %v711, %v737
    %741 = vrot.lane.b32.xlu0 %v738, 32
    %v742 = vpop.permute.xlu0 %741
    %745 = vrot.lane.b32.xlu0 %v739, 64
    %v746 = vpop.permute.xlu0 %745
    %v748 = vsel %vm348, %v742, %v746
    %v750 = vsel %vm359, %v748, 0
    %752 = vmatprep.subr.mxu0 %v49
    %753 = vmatpush1.msra.mxu0 %v48
    %754 = vmatprep.subr.mxu0 %v51
    %755 = vmatpush1.msra.mxu0 %v50
    %756 = vmatprep.subr.mxu0 %v53
    %757 = vmatpush1.msra.mxu0 %v52
    %758 = vmatprep.subr.mxu0 %v55
    %759 = vmatpush1.msra.mxu0 %v54
    %760 = vmatprep.subr.mxu0 %v57
    %761 = vmatpush1.msra.mxu0 %v56
    %762 = vmatprep.subr.mxu0 %v59
    %763 = vmatpush1.msra.mxu0 %v58
    %764 = vmatprep.subr.mxu0 %v61
    %765 = vmatpush1.msra.mxu0 %v60
    %766 = vmatprep.subr.mxu0 %v63
    %767 = vmatpush1.msra.mxu0 %v62
    %768 = vmatprep.subr.mxu0 0.0
    %769 = vmatpush1.msra.mxu0 0.0
    %770 = vmatprep.subr.mxu0 0.0
    %771 = vmatpush1.msra.mxu0 0.0
    %772 = vmatprep.subr.mxu0 0.0
    %773 = vmatpush1.msra.mxu0 0.0
    %774 = vmatprep.subr.mxu0 0.0
    %775 = vmatpush1.msra.mxu0 0.0
    %776 = vmatprep.subr.mxu0 0.0
    %777 = vmatpush1.msra.mxu0 0.0
    %778 = vmatprep.subr.mxu0 0.0
    %779 = vmatpush1.msra.mxu0 0.0
    %780 = vmatprep.subr.mxu0 0.0
    %781 = vmatpush1.msra.mxu0 0.0
    %782 = vmatprep.subr.mxu0 0.0
    %783 = vmatpush1.msra.mxu0 0.0
    %784 = vmatprep.subr.mxu0 0.0
    %785 = vmatpush1.msra.mxu0 0.0
    %786 = vmatprep.subr.mxu0 0.0
    %787 = vmatpush1.msra.mxu0 0.0
    %788 = vmatprep.subr.mxu0 0.0
    %789 = vmatpush1.msra.mxu0 0.0
    %790 = vmatprep.subr.mxu0 0.0
    %791 = vmatpush1.msra.mxu0 0.0
    %792 = vmatprep.subr.mxu0 0.0
    %793 = vmatpush1.msra.mxu0 0.0
    %794 = vmatprep.subr.mxu0 0.0
    %795 = vmatpush1.msra.mxu0 0.0
    %796 = vmatprep.subr.mxu0 0.0
    %797 = vmatpush1.msra.mxu0 0.0
    %798 = vmatprep.subr.mxu0 0.0
    %799 = vmatpush1.msra.mxu0 0.0
    %800 = vmatprep.subr.mxu0 0.0
    %801 = vmatpush1.msra.mxu0 0.0
    %802 = vmatprep.subr.mxu0 0.0
    %803 = vmatpush1.msra.mxu0 0.0
    %804 = vmatprep.subr.mxu0 0.0
    %805 = vmatpush1.msra.mxu0 0.0
    %806 = vmatprep.subr.mxu0 0.0
    %807 = vmatpush1.msra.mxu0 0.0
    %808 = vmatprep.subr.mxu0 0.0
    %809 = vmatpush1.msra.mxu0 0.0
    %810 = vmatprep.subr.mxu0 0.0
    %811 = vmatpush1.msra.mxu0 0.0
    %812 = vmatprep.subr.mxu0 0.0
    %813 = vmatpush1.msra.mxu0 0.0
    %814 = vmatprep.subr.mxu0 0.0
    %815 = vmatpush1.msra.mxu0 0.0
    %816 = vmatprep.mubr.f32.mxu0 0.0
    %817 = vmatmul.mubr.f32.gmra.mrb[0].mxu0 %v750
    %v818 = vpop.f32.mrb[0].mxu0
    %v819 = vadd.f32 %v618, %v818
    %v820 = vpop.f32.mrb[0].mxu0
    %v821 = vadd.f32 %v619, %v820
    %822 = vdwg.mxu0
    %v823 = vtanh.pop %v819
    %v824 = vtanh.pop %v821
    %v825 = vxor.u32 %v819, 2147483648
    %v826 = vxor.u32 %v821, 2147483648
    %v827 = vmul.f32 %v825, 1.442695
    %v828 = vpow.pop %v827
    %v829 = vmul.f32 %v826, 1.442695
    %v830 = vpow.pop %v829
    %v831 = vadd.f32 %v828, 1.0
    %v832 = vadd.f32 %v830, 1.0
    %v833 = vrcp.pop %v831
    %v834 = vmul.f32 1.0, %v833
    %v835 = vrcp.pop %v832
    %v836 = vmul.f32 1.0, %v835
    %v837 = vsel %vm284, %v823, %v834
    %v838 = vsel %vm285, %v824, %v836
    %839 = vrot.lane.b32.xlu0 %v837, 64
    %v840 = vpop.permute.xlu0 %839
    %841 = vrot.lane.b32.xlu0 %v838, 64
    %v842 = vpop.permute.xlu0 %841
    %v843 = vsel %vm315, %v840, %v842
    %v844 = vsel %vm315, %v842, %v840
    %v845 = vmul.f32 %v837, %v843
    %v846 = vmul.f32 %v838, %v844
    %847 = vrot.lane.b32.xlu0 %v845, 32
    %v848 = vpop.permute.xlu0 %847
    %849 = vrot.lane.b32.xlu0 %v846, 32
    %v850 = vpop.permute.xlu0 %849
    %v851 = vsel %vm292, %v848, %v850
    %v852 = vsel %vm292, %v850, %v848
    %v853 = vmul.f32 %v837, %v728
    %v854 = vmul.f32 %v838, %v729
    %v855 = vadd.f32 %v852, %v853
    %v856 = vadd.f32 %v851, %v854
    %857 = vrot.lane.b32.xlu0 %v855, 64
    %v858 = vpop.permute.xlu0 %857
    %859 = vrot.lane.b32.xlu0 %v856, 64
    %v860 = vpop.permute.xlu0 %859
    %v861 = vsel %vm315, %v858, %v860
    %v862 = vsel %vm315, %v860, %v858
    %v863 = vtanh.pop %v862
    %v864 = vtanh.pop %v861
    %v865 = vmul.f32 %v837, %v863
    %v866 = vmul.f32 %v838, %v864
    %868 = vrot.lane.b32.xlu0 %v865, 32
    %v869 = vpop.permute.xlu0 %868
    %872 = vrot.lane.b32.xlu0 %v866, 64
    %v873 = vpop.permute.xlu0 %872
    %v875 = vsel %vm348, %v869, %v873
    %v876 = vrot.slane %v617, 7
    %v878 = vrot.slane %v748, 6
    %v881 = vrot.slane %v875, 5
    %vm883 = vcmask 1040384
    %v884 = vsel %vm883, %v486, %v876
    %vm885 = vcmask 1041408
    %v886 = vsel %vm885, %v884, %v878
    %vm887 = vcmask 1042432
    %v888 = vsel %vm887, %v886, %v881
    %890 = vrot.lane.b32.xlu0 %v888, 96
    %v891 = vpop.permute.xlu0 %890
    %v892 = vsel %vm348, %v891, 0
    %894 = vmatprep.subr.mxu0 0.0
    %895 = vmatpush1.msra.mxu0 %v64
    %896 = vmatprep.subr.mxu0 0.0
    %897 = vmatpush1.msra.mxu0 %v65
    %898 = vmatprep.subr.mxu0 0.0
    %899 = vmatpush1.msra.mxu0 %v66
    %900 = vmatprep.subr.mxu0 0.0
    %901 = vmatpush1.msra.mxu0 %v67
    %902 = vmatprep.subr.mxu0 0.0
    %903 = vmatpush1.msra.mxu0 0.0
    %904 = vmatprep.subr.mxu0 0.0
    %905 = vmatpush1.msra.mxu0 0.0
    %906 = vmatprep.subr.mxu0 0.0
    %907 = vmatpush1.msra.mxu0 0.0
    %908 = vmatprep.subr.mxu0 0.0
    %909 = vmatpush1.msra.mxu0 0.0
    %910 = vmatprep.subr.mxu0 0.0
    %911 = vmatpush1.msra.mxu0 0.0
    %912 = vmatprep.subr.mxu0 0.0
    %913 = vmatpush1.msra.mxu0 0.0
    %914 = vmatprep.subr.mxu0 0.0
    %915 = vmatpush1.msra.mxu0 0.0
    %916 = vmatprep.subr.mxu0 0.0
    %917 = vmatpush1.msra.mxu0 0.0
    %918 = vmatprep.subr.mxu0 0.0
    %919 = vmatpush1.msra.mxu0 0.0
    %920 = vmatprep.subr.mxu0 0.0
    %921 = vmatpush1.msra.mxu0 0.0
    %922 = vmatprep.subr.mxu0 0.0
    %923 = vmatpush1.msra.mxu0 0.0
    %924 = vmatprep.subr.mxu0 0.0
    %925 = vmatpush1.msra.mxu0 0.0
    %926 = vmatprep.subr.mxu0 0.0
    %927 = vmatpush1.msra.mxu0 0.0
    %928 = vmatprep.subr.mxu0 0.0
    %929 = vmatpush1.msra.mxu0 0.0
    %930 = vmatprep.subr.mxu0 0.0
    %931 = vmatpush1.msra.mxu0 0.0
    %932 = vmatprep.subr.mxu0 0.0
    %933 = vmatpush1.msra.mxu0 0.0
    %934 = vmatprep.subr.mxu0 0.0
    %935 = vmatpush1.msra.mxu0 0.0
    %936 = vmatprep.subr.mxu0 0.0
    %937 = vmatpush1.msra.mxu0 0.0
    %938 = vmatprep.subr.mxu0 0.0
    %939 = vmatpush1.msra.mxu0 0.0
    %940 = vmatprep.subr.mxu0 0.0
    %941 = vmatpush1.msra.mxu0 0.0
    %942 = vmatprep.subr.mxu0 0.0
    %943 = vmatpush1.msra.mxu0 0.0
    %944 = vmatprep.subr.mxu0 0.0
    %945 = vmatpush1.msra.mxu0 0.0
    %946 = vmatprep.subr.mxu0 0.0
    %947 = vmatpush1.msra.mxu0 0.0
    %948 = vmatprep.subr.mxu0 0.0
    %949 = vmatpush1.msra.mxu0 0.0
    %950 = vmatprep.subr.mxu0 0.0
    %951 = vmatpush1.msra.mxu0 0.0
    %952 = vmatprep.subr.mxu0 0.0
    %953 = vmatpush1.msra.mxu0 0.0
    %954 = vmatprep.subr.mxu0 0.0
    %955 = vmatpush1.msra.mxu0 0.0
    %956 = vmatprep.subr.mxu0 0.0
    %957 = vmatpush1.msra.mxu0 0.0
    %958 = vmatprep.mubr.f32.mxu0 0.0
    %959 = vmatmul.mubr.f32.gmra.mrb[0].mxu0 %v892
    %v960 = vpop.f32.mrb[0].mxu0
    %v961 = vadd.f32 %v42, %v960
    %v962 = vpop.f32.mrb[0].mxu0
    %963 = vdwg.mxu0
    %v964 = vmul.f32 %v961, 0.5
    %v965 = vmul.f32 %v961, 0.70710677
    %v966 = verf.f32.pop %v965
    %v967 = vadd.f32 %v966, 1.0
    %v968 = vmul.f32 %v964, %v967
    %v970 = vsel %vm359, %v968, 0
    %972 = vmatprep.subr.mxu0 0.0
    %973 = vmatpush1.msra.mxu0 %v68
    %974 = vmatprep.subr.mxu0 0.0
    %975 = vmatpush1.msra.mxu0 %v69
    %976 = vmatprep.subr.mxu0 0.0
    %977 = vmatpush1.msra.mxu0 %v70
    %978 = vmatprep.subr.mxu0 0.0
    %979 = vmatpush1.msra.mxu0 %v71
    %980 = vmatprep.subr.mxu0 0.0
    %981 = vmatpush1.msra.mxu0 %v72
    %982 = vmatprep.subr.mxu0 0.0
    %983 = vmatpush1.msra.mxu0 %v73
    %984 = vmatprep.subr.mxu0 0.0
    %985 = vmatpush1.msra.mxu0 %v74
    %986 = vmatprep.subr.mxu0 0.0
    %987 = vmatpush1.msra.mxu0 %v75
    %988 = vmatprep.subr.mxu0 0.0
    %989 = vmatpush1.msra.mxu0 0.0
    %990 = vmatprep.subr.mxu0 0.0
    %991 = vmatpush1.msra.mxu0 0.0
    %992 = vmatprep.subr.mxu0 0.0
    %993 = vmatpush1.msra.mxu0 0.0
    %994 = vmatprep.subr.mxu0 0.0
    %995 = vmatpush1.msra.mxu0 0.0
    %996 = vmatprep.subr.mxu0 0.0
    %997 = vmatpush1.msra.mxu0 0.0
    %998 = vmatprep.subr.mxu0 0.0
    %999 = vmatpush1.msra.mxu0 0.0
    %1000 = vmatprep.subr.mxu0 0.0
    %1001 = vmatpush1.msra.mxu0 0.0
    %1002 = vmatprep.subr.mxu0 0.0
    %1003 = vmatpush1.msra.mxu0 0.0
    %1004 = vmatprep.subr.mxu0 0.0
    %1005 = vmatpush1.msra.mxu0 0.0
    %1006 = vmatprep.subr.mxu0 0.0
    %1007 = vmatpush1.msra.mxu0 0.0
    %1008 = vmatprep.subr.mxu0 0.0
    %1009 = vmatpush1.msra.mxu0 0.0
    %1010 = vmatprep.subr.mxu0 0.0
    %1011 = vmatpush1.msra.mxu0 0.0
    %1012 = vmatprep.subr.mxu0 0.0
    %1013 = vmatpush1.msra.mxu0 0.0
    %1014 = vmatprep.subr.mxu0 0.0
    %1015 = vmatpush1.msra.mxu0 0.0
    %1016 = vmatprep.subr.mxu0 0.0
    %1017 = vmatpush1.msra.mxu0 0.0
    %1018 = vmatprep.subr.mxu0 0.0
    %1019 = vmatpush1.msra.mxu0 0.0
    %1020 = vmatprep.subr.mxu0 0.0
    %1021 = vmatpush1.msra.mxu0 0.0
    %1022 = vmatprep.subr.mxu0 0.0
    %1023 = vmatpush1.msra.mxu0 0.0
    %1024 = vmatprep.subr.mxu0 0.0
    %1025 = vmatpush1.msra.mxu0 0.0
    %1026 = vmatprep.subr.mxu0 0.0
    %1027 = vmatpush1.msra.mxu0 0.0
    %1028 = vmatprep.subr.mxu0 0.0
    %1029 = vmatpush1.msra.mxu0 0.0
    %1030 = vmatprep.subr.mxu0 0.0
    %1031 = vmatpush1.msra.mxu0 0.0
    %1032 = vmatprep.subr.mxu0 0.0
    %1033 = vmatpush1.msra.mxu0 0.0
    %1034 = vmatprep.subr.mxu0 0.0
    %1035 = vmatpush1.msra.mxu0 0.0
    %1036 = vmatprep.mubr.f32.mxu0 0.0
    %1037 = vmatmul.mubr.f32.gmra.mrb[0].mxu0 %v970
    %v1038 = vpop.f32.mrb[0].mxu0
    %v1039 = vadd.f32 %v43, %v1038
    %v1040 = vpop.f32.mrb[0].mxu0
    %1041 = vdwg.mxu0
    %vm1042 = vcmask 35840
    %1043 = vst.msk [vmem:[#allocation7] sm:$0xf] %vm1042, %v1039
    // Predicated region
    $region18: #{cnn_lstm_forward.1} parent=1 // pred_check
      _
    $region19: #{cnn_lstm_forward.1} parent=1 // pred_check_branch
      %1045 = sbr.rel (0) target = $region21
    $region20: #{cnn_lstm_forward.1} parent=1 // pred_region
      %s1047 = ssub.s32 64, 64
      %1048 = vsyncadd [#allocation4], %s1047
      %s1050 = sshll.u32 [#allocation7], 4
      %s1051 = int_to_ptr.vmem [resolvable:$true] %s1050
      %1053 = dma.vmem_to_hbm [thread:$0]  %s1051, 64, %s2, [#allocation4]
    $region21: #{cnn_lstm_forward.1} parent=1 // pred_fallthru
      _
    // Predicated region
    $region22: #{cnn_lstm_forward.1} parent=1 // pred_check
      _
    $region23: #{cnn_lstm_forward.1} parent=1 // pred_check_branch
      %1055 = sbr.rel (0) target = $region25
    $region24: #{cnn_lstm_forward.1} parent=1 // pred_region
      %1056 = dma.done [#allocation4], 64
    $region25: #{cnn_lstm_forward.1} parent=1 // pred_fallthru
      _
    %1057 = vsyncpa [#allocation3], 1
    %1058 = vsyncpa [#allocation6], 1
    %1059 = vsyncpa [#allocation4], 1

</llo_original>
